<compile_context>
chip_gen: v5e
topology: v5e:2x2
jax: 0.10.0
libtpu: 0.0.40
codegen_flags: <defaults>
</compile_context>

<pallas_src>
import jax
import jax.numpy as jnp
import numpy as np
from jax import lax
from jax.experimental import pallas as pl
from jax.experimental.pallas import tpu as pltpu

EPS = 1e-5


# ---------------------------------------------------------------------------
# Pallas kernels
# ---------------------------------------------------------------------------
def _stats_kernel(x_ref, o_ref):
    """Per-image (sum, sum_sq) over H, lane-dense over the folded W*C axis."""
    x = x_ref[...]                                   # (H, W*C)
    s = jnp.sum(x, axis=0, keepdims=True)            # (1, W*C)
    ss = jnp.sum(x * x, axis=0, keepdims=True)       # (1, W*C)
    o_ref[...] = jnp.concatenate([s, ss], axis=0)    # (2, W*C)


def _make_bn_relu_conv_kernel(H, W, cin, cout, with_bias, with_stats):
    wc_in = W * cin
    wc_out = W * cout

    def kernel(*refs):
        refs = list(refs)
        x_ref, s_ref, t_ref, w_ref = refs[:4]
        idx = 4
        b_ref = None
        if with_bias:
            b_ref = refs[idx]
            idx += 1
        o_ref = refs[idx]
        idx += 1
        st_ref = refs[idx] if with_stats else None

        # BN (precomputed per-channel scale/shift, tiled over W) + ReLU,
        # on the lane-dense folded (H, W*cin) layout.
        h = jnp.maximum(x_ref[...] * s_ref[...] + t_ref[...], 0.0)

        # H halo: two zero rows kept as a value (no padded VMEM scratch; the
        # W halo is folded into the banded weights).
        zrow = jnp.zeros((1, wc_in), jnp.float32)
        hp = jnp.concatenate([zrow, h, zrow], axis=0)          # (H+2, W*cin)

        # 3x3 conv == 3 banded matmuls (one per kernel row), bf16 operands,
        # f32 accumulation on the MXU.
        acc = jnp.zeros((H, wc_out), jnp.float32)
        for dy in range(3):
            lhs = hp[dy:dy + H, :].astype(jnp.bfloat16)         # (H, W*cin)
            acc = acc + jnp.dot(lhs, w_ref[dy],
                                preferred_element_type=jnp.float32)
        if with_bias:
            acc = acc + b_ref[...]
        o_ref[...] = acc.astype(o_ref.dtype)                    # (H, W*cout)

        if with_stats:
            # Per-image partial stats of this stage's output (for the next BN),
            # computed from the f32 accumulator while it is still resident.
            s = jnp.sum(acc, axis=0, keepdims=True)             # (1, W*cout)
            ss = jnp.sum(acc * acc, axis=0, keepdims=True)      # (1, W*cout)
            st_ref[...] = jnp.concatenate([s, ss], axis=0)      # (2, W*cout)

    return kernel


# ---------------------------------------------------------------------------
# Wrappers around pallas_call
# ---------------------------------------------------------------------------
def _vmem_limit(block_bytes):
    # Double-buffered blocks + headroom, clamped below v7x's 64 MiB physical VMEM.
    return int(min(max(4 * block_bytes + (2 << 20), 8 << 20), 56 << 20))


def _batch_stats(xf):
    """Pallas pass producing per-image (sum, sum_sq); reduced over N in JAX."""
    N, H, WC = xf.shape
    block_bytes = 4 * (H * WC + 2 * WC)
    partial = pl.pallas_call(
        _stats_kernel,
        out_shape=jax.ShapeDtypeStruct((N, 2, WC), jnp.float32),
        grid=(N,),
        in_specs=[pl.BlockSpec((None, H, WC), lambda n: (n, 0, 0))],
        out_specs=pl.BlockSpec((None, 2, WC), lambda n: (n, 0, 0)),
        compiler_params=pltpu.CompilerParams(
            dimension_semantics=("parallel",),
            vmem_limit_bytes=_vmem_limit(block_bytes)),
    )(xf)
    return jnp.sum(partial, axis=0)                   # (2, W*C)


def _banded_weights(w_hwio, W, dtype=jnp.bfloat16):
    """(3,3,Cin,Cout) HWIO -> (3, W*Cin, W*Cout) banded matrices (one per ky).

    band[ky][wi*Cin+ci, wo*Cout+co] = w[ky, wi-wo+1, ci, co] for |wi-wo| <= 1,
    else 0.  Missing out-of-range columns implement the W zero padding.
    """
    KH, KW, cin, cout = w_hwio.shape
    bands = []
    for ky in range(KH):
        band = jnp.zeros((W, cin, W, cout), jnp.float32)
        for kx in range(KW):
            off = kx - 1
            wo = np.arange(max(0, -off), min(W, W - off))
            wi = wo + off
            band = band.at[wi, :, wo, :].set(w_hwio[ky, kx])
        bands.append(band.reshape(W * cin, W * cout))
    return jnp.stack(bands, axis=0).astype(dtype)


def _bn_relu_conv(xf, scale, shift, w_banded, bias, H, W, cin, cout,
                  with_stats=False):
    """One (BN -> ReLU -> Conv3x3) stage on the folded (N, H, W*C) layout.

    If with_stats, also returns the (2, W*cout) batch (sum, sum_sq) of the
    stage output, fused into the same pass (feeds the next BatchNorm)."""
    N = xf.shape[0]
    wc_in, wc_out = W * cin, W * cout

    s = jnp.tile(scale.astype(jnp.float32), W).reshape(1, wc_in)
    t = jnp.tile(shift.astype(jnp.float32), W).reshape(1, wc_in)

    with_bias = bias is not None
    inputs = [xf, s, t, w_banded]
    in_specs = [
        pl.BlockSpec((None, H, wc_in), lambda n: (n, 0, 0)),
        pl.BlockSpec((1, wc_in), lambda n: (0, 0)),
        pl.BlockSpec((1, wc_in), lambda n: (0, 0)),
        pl.BlockSpec((3, wc_in, wc_out), lambda n: (0, 0, 0)),
    ]
    if with_bias:
        inputs.append(jnp.tile(bias.astype(jnp.float32), W).reshape(1, wc_out))
        in_specs.append(pl.BlockSpec((1, wc_out), lambda n: (0, 0)))

    out_shapes = [jax.ShapeDtypeStruct((N, H, wc_out), jnp.float32)]
    out_specs = [pl.BlockSpec((None, H, wc_out), lambda n: (n, 0, 0))]
    if with_stats:
        out_shapes.append(jax.ShapeDtypeStruct((N, 2, wc_out), jnp.float32))
        out_specs.append(pl.BlockSpec((None, 2, wc_out), lambda n: (n, 0, 0)))

    block_bytes = (4 * (H * wc_in + H * wc_out + 2 * wc_in + 3 * wc_out)
                   + 2 * 3 * wc_in * wc_out)
    result = pl.pallas_call(
        _make_bn_relu_conv_kernel(H, W, cin, cout, with_bias, with_stats),
        out_shape=tuple(out_shapes),
        grid=(N,),
        in_specs=in_specs,
        out_specs=out_specs,
        compiler_params=pltpu.CompilerParams(
            dimension_semantics=("parallel",),
            vmem_limit_bytes=_vmem_limit(block_bytes)),
    )(*inputs)

    if with_stats:
        y, partial = result
        return y, jnp.sum(partial, axis=0)            # (N,H,WCout), (2, W*cout)
    return result[0], None


def double_conv_forward(x_nchw, params):
    """Pallas forward. x_nchw: (N, Cin, H, W) f32 -> (N, Cout, H, W) f32."""
    g1, b1, w1_hwio, cb1, g2, b2, w2_hwio, cb2 = params
    del cb1  # conv1 bias is exactly cancelled by BN2's per-channel mean subtraction
    N, cin, H, W = x_nchw.shape
    cout = w1_hwio.shape[-1]

    # NCHW -> lane-dense folded layout (N, H, W*C).
    xf = jnp.transpose(x_nchw, (0, 2, 3, 1)).reshape(N, H, W * cin)
    xf = xf.astype(jnp.float32)
    count = N * H * W

    def scale_shift(stats_2wc, gamma, beta, c):
        st = stats_2wc.reshape(2, W, c).sum(axis=1)           # (2, C)
        mean = st[0] / count
        var = jnp.maximum(st[1] / count - mean * mean, 0.0)   # biased (training mode)
        scale = gamma * lax.rsqrt(var + EPS)
        return scale, beta - mean * scale

    # ---- BN1 stats -> BN1 + ReLU + Conv1 (bias dropped, fused y1 stats) ----
    s1, t1 = scale_shift(_batch_stats(xf), g1, b1, cin)
    y1, y1_stats = _bn_relu_conv(xf, s1, t1, _banded_weights(w1_hwio, W), None,
                                 H, W, cin, cout, with_stats=True)

    # ---- BN2 (stats came from the fused pass) + ReLU + Conv2 (+ bias) ----
    s2, t2 = scale_shift(y1_stats, g2, b2, cout)
    y2, _ = _bn_relu_conv(y1, s2, t2, _banded_weights(w2_hwio, W), cb2,
                          H, W, cout, cout, with_stats=False)

    # folded -> NCHW
    return jnp.transpose(y2.reshape(N, H, W, cout), (0, 3, 1, 2))


# ---------------------------------------------------------------------------
# Reference + test harness
# ---------------------------------------------------------------------------
def _reference_forward(x_nchw, params, conv_dtype=jnp.float32):
    """Pure-JAX reference with PyTorch training-mode BN semantics.

    conv_dtype=bfloat16 mirrors the kernel's precision policy (bf16 MXU
    operands, f32 accumulation)."""
    g1, b1, w1_hwio, cb1, g2, b2, w2_hwio, cb2 = params

    def bn(x, g, b):
        m = jnp.mean(x, axis=(0, 2, 3), keepdims=True)
        v = jnp.mean((x - m) ** 2, axis=(0, 2, 3), keepdims=True)
        return (x - m) / jnp.sqrt(v + EPS) * g.reshape(1, -1, 1, 1) + b.reshape(1, -1, 1, 1)

    def conv(x, w_hwio, bias):
        w_oihw = jnp.transpose(w_hwio, (3, 2, 0, 1)).astype(conv_dtype)
        y = lax.conv_general_dilated(
            x.astype(conv_dtype), w_oihw, window_strides=(1, 1), padding="SAME",
            dimension_numbers=("NCHW", "OIHW", "NCHW"),
            preferred_element_type=jnp.float32)
        return y + bias.reshape(1, -1, 1, 1)

    h = jax.nn.relu(bn(x_nchw, g1, b1))
    h = conv(h, w1_hwio, cb1)
    h = jax.nn.relu(bn(h, g2, b2))
    h = conv(h, w2_hwio, cb2)
    return h


def init_params(key, in_ch, out_ch):
    ks = jax.random.split(key, 8)
    g1 = 1.0 + 0.1 * jax.random.normal(ks[0], (in_ch,), jnp.float32)
    b1 = 0.1 * jax.random.normal(ks[1], (in_ch,), jnp.float32)
    # PyTorch Conv2d weight is (out_ch, in_ch, 3, 3); stored here as HWIO.
    w1 = 0.2 * jax.random.normal(ks[2], (3, 3, in_ch, out_ch), jnp.float32)
    cb1 = 0.1 * jax.random.normal(ks[3], (out_ch,), jnp.float32)
    g2 = 1.0 + 0.1 * jax.random.normal(ks[4], (out_ch,), jnp.float32)
    b2 = 0.1 * jax.random.normal(ks[5], (out_ch,), jnp.float32)
    w2 = 0.2 * jax.random.normal(ks[6], (3, 3, out_ch, out_ch), jnp.float32)
    cb2 = 0.1 * jax.random.normal(ks[7], (out_ch,), jnp.float32)
    return (g1, b1, w1, cb1, g2, b2, w2, cb2)


if __name__ == "__main__":
    key = jax.random.PRNGKey(0)
    k_x, k_p = jax.random.split(key)

    N, in_ch, out_ch, H, W = 2, 4, 8, 16, 16
    x = jax.random.normal(k_x, (N, in_ch, H, W), jnp.float32)
    params = init_params(k_p, in_ch, out_ch)

    out = jax.block_until_ready(double_conv_forward(x, params))
    assert out.shape == (N, out_ch, H, W)

    # Tight check vs a reference using the same precision policy (bf16 MXU
    # operands, f32 accumulation).
    ref_bf16 = jax.block_until_ready(
        _reference_forward(x, params, conv_dtype=jnp.bfloat16))
    assert jnp.allclose(out, ref_bf16, atol=5e-3, rtol=5e-3), (
        f"max abs diff vs bf16 reference: {jnp.max(jnp.abs(out - ref_bf16))}")

    # Loose sanity check vs the full-f32 reference (bf16 rounding only).
    ref_f32 = jax.block_until_ready(_reference_forward(x, params))
    assert jnp.allclose(out, ref_f32, atol=1e-1, rtol=1e-1), (
        f"max abs diff vs f32 reference: {jnp.max(jnp.abs(out - ref_f32))}")

    print("KERNEL_OK")
</pallas_src>

<mosaic_0001>
module attributes {stable_mosaic.version = 11 : i64} {
  func.func @_stats_kernel(%arg0: i32, %arg1: memref<1x16x64xf32, #tpu.memory_space<vmem>>, %arg2: memref<1x2x64xf32, #tpu.memory_space<vmem>>) attributes {dimension_semantics = [#tpu.dimension_semantics<parallel>], iteration_bounds = array<i64: 2>, scalar_prefetch = 0 : i64, scratch_operands = 0 : i64, tpu.core_type = #tpu.core_type<tc>, window_params = [{transform_indices = @transform_0, window_bounds = array<i64: 1, 16, 64>}, {transform_indices = @transform_1, window_bounds = array<i64: 1, 2, 64>}]} {
    %c0 = arith.constant 0 : index
    %c0_0 = arith.constant 0 : index
    %c0_1 = arith.constant 0 : index
    %0 = vector.load %arg1[%c0, %c0_0, %c0_1] : memref<1x16x64xf32, #tpu.memory_space<vmem>>, vector<1x16x64xf32>
    %1 = vector.shape_cast %0 : vector<1x16x64xf32> to vector<16x64xf32>
    %cst = arith.constant dense<0.000000e+00> : vector<64xf32>
    %2 = vector.multi_reduction <add>, %1, %cst [0] : vector<16x64xf32> to vector<64xf32>
    %3 = vector.shape_cast %2 : vector<64xf32> to vector<1x64xf32>
    %4 = arith.mulf %1, %1 : vector<16x64xf32>
    %cst_2 = arith.constant dense<0.000000e+00> : vector<64xf32>
    %5 = vector.multi_reduction <add>, %4, %cst_2 [0] : vector<16x64xf32> to vector<64xf32>
    %6 = vector.shape_cast %5 : vector<64xf32> to vector<1x64xf32>
    %7 = tpu.concatenate %3, %6 in 0 : vector<1x64xf32>, vector<1x64xf32> -> vector<2x64xf32>
    %c0_3 = arith.constant 0 : index
    %c0_4 = arith.constant 0 : index
    %c0_5 = arith.constant 0 : index
    %8 = vector.load %arg2[%c0_3, %c0_4, %c0_5] : memref<1x2x64xf32, #tpu.memory_space<vmem>>, vector<1x2x64xf32>
    %9 = vector.shape_cast %8 : vector<1x2x64xf32> to vector<2x64xf32>
    %10 = vector.shape_cast %7 : vector<2x64xf32> to vector<1x2x64xf32>
    tpu.vector_store %arg2[%c0_3, %c0_4, %c0_5], %10 {strides = array<i32>} : memref<1x2x64xf32, #tpu.memory_space<vmem>>, vector<1x2x64xf32>,
    return
  }
  func.func @transform_0(%arg0: i32) -> (i32, i32, i32) {
    %c0_i32 = arith.constant 0 : i32
    %c0_i32_0 = arith.constant 0 : i32
    %c0_i32_1 = arith.constant 0 : i32
    return %arg0, %c0_i32, %c0_i32_0 : i32, i32, i32
  }
  func.func @transform_1(%arg0: i32) -> (i32, i32, i32) {
    %c0_i32 = arith.constant 0 : i32
    %c0_i32_0 = arith.constant 0 : i32
    %c0_i32_1 = arith.constant 0 : i32
    return %arg0, %c0_i32, %c0_i32_0 : i32, i32, i32
  }
}

</mosaic_0001>

<llo_original>
// kernel: tpu_custom_call.1
$region0: #{tpu_custom_call.1}
  #allocation0 [shape = 'u32[]', space=smem, size = 0x4, offset = 0x4, fixed_abs, tag = 'smem constant byte address 0x4 - core index']
  #allocation1 [shape = 'u32[72,128]{1,0:T(1,128)}', space=vmem, size = 0x9000, scoped, tag = 'internal scratch']
  %s0 = inlined_call_operand.hbm [shape: f32[2,16,64], index: 0, kind: input, shape index: {}]
  %s1 = inlined_call_operand.hbm [shape: f32[2,2,64], index: 1, kind: output, shape index: {}]
  %s2 = sld [smem:[#allocation0]]
  $region41: #{tpu_custom_call.1} parent=0
    _
  %s4 = ssub.s32 1, %s2
  %s5 = scalar_select 0, %s4, %s2
  $region1: #{tpu_custom_call.1} parent=0
    #allocation2 [shape = 'u8[16384]{0}', space=vmem, size = 0x4000, scoped, tag = 'input window, operand 0']
    #allocation3 [shape = 's32[2]{0}', space=sflag, size = 0x8, scoped, tag = 'scoped memory for tpu_custom_call.1']
    #allocation4 [shape = 's32[2]{0}', space=sflag, size = 0x8, scoped, tag = 'scoped memory for tpu_custom_call.1']
    #allocation5 [shape = 'u8[2048]{0}', space=vmem, size = 0x800, scoped, tag = 'output window, operand 0']
    %6 = vsyncpa [#allocation3], 0
    %s7 = scalar_lea.sflag [#allocation3], 1
    %8 = vsyncpa %s7, 0
    %9 = vsyncpa [#allocation4], 0
    %s10 = scalar_lea.sflag [#allocation4], 1
    %11 = vsyncpa %s10, 0
    loop: start=0, step=1, limit=4
    $region2: #{tpu_custom_call.1} parent=1 // loop_pre_header
      _
    $region3: #{tpu_custom_call.1} parent=1 // loop_header
      %s13 = sphi 0, %s17
      %p14 = scmp.ge.s32.totalorder %s13, 4
      %s23 = sphi 0, %s25
      %s26 = sphi 0, %s23
      %s27 = sphi 0, %s26
      %s43 = sphi 0, %s27
      %s49 = sphi 0, %s51
      %s52 = sphi 0, %s49
      %s53 = sphi 0, %s52
      %s69 = sphi 0, %s53
    $region4: #{tpu_custom_call.1} parent=1 // loop_header_branch
      %16 = sbr.rel (%p14) target = $region8
    $region5: #{tpu_custom_call.1} parent=1 // loop_body
      %s18 = ssub.s32 %s13, 1
      %s19 = ssub.s32 %s13, 2
      %s20 = sadd.s32 %s13, 1
      %s21 = ssub.s32 %s13, %s20
      %p22 = scmp.eq.s32.totalorder %s21, 0
      %s24 = sadd.s32 %s23, 1
      %s25 = scalar_select %p22, %s23, %s24
      %p28 = pneg %p22
      %p29 = scmp.eq.s32.totalorder %s13, 1
      %p30 = por %p28, %p29
      %p31 = scmp.ne.s32.totalorder %s23, %s26
      %p32 = scmp.eq.s32.totalorder %s13, 0
      %p33 = por %p31, %p32
      %p34 = scmp.ne.s32.totalorder %s23, %s26
      %p35 = scmp.eq.s32.totalorder %s18, 1
      %p36 = por %p34, %p35
      %p37 = scmp.ne.s32.totalorder %s26, %s27
      %p38 = scmp.eq.s32.totalorder %s18, 0
      %p39 = por %p37, %p38
      %p40 = scmp.ne.s32.totalorder %s26, %s27
      %p41 = scmp.eq.s32.totalorder %s19, 1
      %p42 = por %p40, %p41
      %p44 = scmp.ne.s32.totalorder %s27, %s43
      %p45 = scmp.eq.s32.totalorder %s19, 0
      %p46 = por %p44, %p45
      %s47 = ssub.s32 %s13, %s20
      %p48 = scmp.eq.s32.totalorder %s47, 0
      %s50 = sadd.s32 %s49, 1
      %s51 = scalar_select %p48, %s49, %s50
      %p54 = pneg %p48
      %p55 = scmp.eq.s32.totalorder %s13, 1
      %p56 = por %p54, %p55
      %p57 = scmp.ne.s32.totalorder %s49, %s52
      %p58 = scmp.eq.s32.totalorder %s13, 0
      %p59 = por %p57, %p58
      %p60 = scmp.ne.s32.totalorder %s49, %s52
      %p61 = scmp.eq.s32.totalorder %s18, 1
      %p62 = por %p60, %p61
      %p63 = scmp.ne.s32.totalorder %s52, %s53
      %p64 = scmp.eq.s32.totalorder %s18, 0
      %p65 = por %p63, %p64
      %p66 = scmp.ne.s32.totalorder %s52, %s53
      %p67 = scmp.eq.s32.totalorder %s19, 1
      %p68 = por %p66, %p67
      %p70 = scmp.ne.s32.totalorder %s53, %s69
      %p71 = scmp.eq.s32.totalorder %s19, 0
      %p72 = por %p70, %p71
      %p73 = scmp.le.s32.totalorder 1, %s13
      %p74 = scmp.lt.s32.totalorder %s13, 3
      %p75 = pnand %p73, %p74
      %p76 = pneg %p75
      // Predicated region
      $region9: #{tpu_custom_call.1} parent=5 // pred_check
        _
      $region10: #{tpu_custom_call.1} parent=5 // pred_check_branch
        %78 = sbr.rel (%p75) target = $region12
      $region11: #{tpu_custom_call.1} parent=5 // pred_region
        %s79 = ssub.s32 %s13, 1
      $region12: #{tpu_custom_call.1} parent=5 // pred_fallthru
        _
      %p80 = scmp.lt.s32.totalorder %s13, 2
      // Predicated region
      $region13: #{tpu_custom_call.1} parent=5 // pred_check
        %p81 = pneg %p80
      $region14: #{tpu_custom_call.1} parent=5 // pred_check_branch
        %83 = sbr.rel (%p81) target = $region16
      $region15: #{tpu_custom_call.1} parent=5 // pred_region
        // Predicated region
        $region17: #{tpu_custom_call.1} parent=15 // pred_check
          %p84 = pneg %p33
        $region18: #{tpu_custom_call.1} parent=15 // pred_check_branch
          %86 = sbr.rel (%p84) target = $region20
        $region19: #{tpu_custom_call.1} parent=15 // pred_region
          %s87 = sand.u32 %s23, 1
          %s88 = scalar_lea.sflag [#allocation3], %s87
          %s89 = sand.u32 %s23, 1
          %s90 = smul.addr %s89, 16
          %s91 = scalar_lea.vmem [#allocation2], %s90
          %93 = vsyncadd %s88, 0
          %s94 = smul.addr %s13, 2
          %s95 = smul.addr %s94, 8
          %s96 = scalar_lea.hbm %s0, %s95
          %s97 = sshll.u32 %s96, 4
          %s98 = int_to_ptr.hbm [resolvable:$true] %s97
          %s99 = sshll.u32 %s91, 4
          %s100 = int_to_ptr.vmem [resolvable:$true] %s99
          %105 = dma.hbm_to_vmem [thread:$0]  %s98, 256, %s100, %s88, 128, 128, 8
        $region20: #{tpu_custom_call.1} parent=15 // pred_fallthru
          _
      $region16: #{tpu_custom_call.1} parent=5 // pred_fallthru
        _
      %p106 = scmp.le.s32.totalorder 1, %s13
      %p107 = scmp.lt.s32.totalorder %s13, 3
      %p108 = pnand %p106, %p107
      %p109 = pneg %p108
      // Predicated region
      $region21: #{tpu_custom_call.1} parent=5 // pred_check
        _
      $region22: #{tpu_custom_call.1} parent=5 // pred_check_branch
        %111 = sbr.rel (%p108) target = $region24
      $region23: #{tpu_custom_call.1} parent=5 // pred_region
        %s112 = ssub.s32 %s13, 1
        %s113 = sand.u32 %s26, 1
        %s114 = scalar_lea.sflag [#allocation3], %s113
        %s115 = sand.u32 %s26, 1
        %s116 = smul.addr %s115, 16
        %s117 = scalar_lea.vmem [#allocation2], %s116
        // Predicated region
        $region25: #{tpu_custom_call.1} parent=23 // pred_check
          %p118 = pneg %p39
        $region26: #{tpu_custom_call.1} parent=23 // pred_check_branch
          %120 = sbr.rel (%p118) target = $region28
        $region27: #{tpu_custom_call.1} parent=23 // pred_region
          %122 = dma.done %s114, 256
        $region28: #{tpu_custom_call.1} parent=23 // pred_fallthru
          _
        %s123 = sand.u32 %s26, 1
        %s124 = scalar_lea.sflag [#allocation3], %s123
        %s125 = sand.u32 %s26, 1
        %s126 = smul.addr %s125, 16
        %s127 = scalar_lea.vmem [#allocation2], %s126
        %p128 = pneg %p39
        %p129 = pneg %p36
        %p130 = pneg %p65
        %p131 = pneg %p62
        %s132 = sand.u32 %s52, 1
        %s133 = scalar_lea.sflag [#allocation4], %s132
        %s134 = sand.u32 %s52, 1
        %s135 = smul.addr %s134, 2
        %s136 = scalar_lea.vmem [#allocation5], %s135
        %v137 = vld [vmem:[%s117] sm:$0xff]
        %v138 = vld [vmem:[%s117 + $0x8] sm:$0xff]
        %vm139 = vcmask 523264
        %v140 = vsel %vm139, %v137, 0.0
        %v141 = vsel %vm139, %v138, 0.0
        %v142 = vadd.f32 %v140, %v141
        %v143 = vrot.slane %v142, 4
        %v144 = vadd.f32 %v142, %v143
        %v145 = vrot.slane %v144, 2
        %v146 = vadd.f32 %v144, %v145
        %v147 = vrot.slane %v146, 1
        %v148 = vadd.f32 %v146, %v147
        %v149 = vmul.f32 %v137, %v137
        %v150 = vmul.f32 %v138, %v138
        %v151 = vsel %vm139, %v149, 0.0
        %v152 = vsel %vm139, %v150, 0.0
        %v153 = vadd.f32 %v151, %v152
        %v154 = vrot.slane %v153, 4
        %v155 = vadd.f32 %v153, %v154
        %v156 = vrot.slane %v155, 2
        %v157 = vadd.f32 %v155, %v156
        %v158 = vrot.slane %v157, 1
        %v159 = vadd.f32 %v157, %v158
        %vm160 = vcmask 1040384
        %v161 = vsel %vm160, %v148, %v159
        %vm162 = vcmask 517120
        %163 = vst.msk [vmem:[%s136] sm:$0x3] %vm162, %v161
        %s164 = sand.u32 %s52, 1
        %s165 = scalar_lea.sflag [#allocation4], %s164
        %s166 = sand.u32 %s52, 1
        %s167 = smul.addr %s166, 2
        %s168 = scalar_lea.vmem [#allocation5], %s167
        // Predicated region
        $region29: #{tpu_custom_call.1} parent=23 // pred_check
          %p169 = pneg %p62
        $region30: #{tpu_custom_call.1} parent=23 // pred_check_branch
          %171 = sbr.rel (%p169) target = $region32
        $region31: #{tpu_custom_call.1} parent=23 // pred_region
          %173 = vsyncadd %s165, 0
          %s174 = smul.addr %s18, 2
          %s175 = scalar_lea.hbm %s1, %s174
          %s177 = sshll.u32 %s168, 4
          %s178 = int_to_ptr.vmem [resolvable:$true] %s177
          %s179 = sshll.u32 %s175, 4
          %s180 = int_to_ptr.hbm [resolvable:$true] %s179
          %182 = dma.vmem_to_hbm [thread:$0]  %s178, 32, %s180, %s165
        $region32: #{tpu_custom_call.1} parent=23 // pred_fallthru
          _
      $region24: #{tpu_custom_call.1} parent=5 // pred_fallthru
        _
      %p183 = scmp.le.s32.totalorder 2, %s13
      // Predicated region
      $region33: #{tpu_custom_call.1} parent=5 // pred_check
        %p184 = pneg %p183
      $region34: #{tpu_custom_call.1} parent=5 // pred_check_branch
        %186 = sbr.rel (%p184) target = $region36
      $region35: #{tpu_custom_call.1} parent=5 // pred_region
        %s187 = ssub.s32 %s13, 2
        // Predicated region
        $region37: #{tpu_custom_call.1} parent=35 // pred_check
          %p188 = pneg %p68
        $region38: #{tpu_custom_call.1} parent=35 // pred_check_branch
          %190 = sbr.rel (%p188) target = $region40
        $region39: #{tpu_custom_call.1} parent=35 // pred_region
          %s191 = sand.u32 %s53, 1
          %s192 = scalar_lea.sflag [#allocation4], %s191
          %s193 = sand.u32 %s53, 1
          %s194 = smul.addr %s193, 2
          %s195 = scalar_lea.vmem [#allocation5], %s194
          %197 = dma.done %s192, 32
        $region40: #{tpu_custom_call.1} parent=35 // pred_fallthru
          _
      $region36: #{tpu_custom_call.1} parent=5 // pred_fallthru
        _
    $region6: #{tpu_custom_call.1} parent=1 // loop_footer
      %s17 = sadd.s32 1, %s13
    $region7: #{tpu_custom_call.1} parent=1 // loop_footer_branch
      %12 = sbr.rel target = $region3
    $region8: #{tpu_custom_call.1} parent=1 // loop_exit
      _
    %198 = vsyncpa [#allocation3], 1
    %s199 = scalar_lea.sflag [#allocation3], 1
    %200 = vsyncpa %s199, 1
    %201 = vsyncpa [#allocation4], 1
    %s202 = scalar_lea.sflag [#allocation4], 1
    %203 = vsyncpa %s202, 1

</llo_original>
